<compile_context>
chip_gen: v7x
topology: tpu7x:2x2x1
jax: 0.10.0
libtpu: 0.0.40
codegen_flags: <defaults>
</compile_context>

<pallas_src>
import functools

import jax
import jax.numpy as jnp
from jax.experimental import pallas as pl
from jax.experimental.pallas import tpu as pltpu


def _round_up(x, m):
    return -(-x // m) * m


def _pick_tile(dim, max_tile, align):
    """Largest multiple of `align` that is <= max_tile and divides `dim`.

    `dim` must itself be a multiple of `align`, so this always terminates and
    never forces extra padding beyond `dim`.
    """
    t = max(min(max_tile, dim) // align * align, align)
    while dim % t != 0:
        t -= align
    return t


def _clamp_vmem_limit(nbytes):
    return max(16 << 20, min(_round_up(nbytes + (4 << 20), 1 << 20), 48 << 20))


# ----------------------------------------------------------------------------
# Kernel 1: tiled image-projection GEMM   o = x @ w + b
#   x:(Bp, Kp) f32   w:(Kp, Dp) bf16   b:(1, Dp) f32   o:(Bp, Dp) bf16
# ----------------------------------------------------------------------------
def _linear_tiled_kernel(x_ref, w_ref, b_ref, o_ref, acc_ref):
    k = pl.program_id(2)

    @pl.when(k == 0)
    def _init():
        acc_ref[...] = jnp.zeros_like(acc_ref)

    # x tile arrives f32 (no separate XLA pad+cast HBM pass); the bf16 cast is
    # cheap VPU work hidden under the MXU.
    acc_ref[...] += jnp.dot(
        x_ref[...].astype(jnp.bfloat16), w_ref[...],
        preferred_element_type=jnp.float32,
    )

    @pl.when(k == pl.num_programs(2) - 1)
    def _finalize():
        # f32 bias epilogue, bf16 store (features are only ever consumed as
        # bf16 by the classifier matmul in the fused tail).
        o_ref[...] = (acc_ref[...] + b_ref[...]).astype(o_ref.dtype)


def pallas_linear_tiled(x_p, w_p, b_p, *, tm_max=256, tk_max=2048):
    """x_p:(Bp, Kp) f32, w_p:(Kp, Dp) bf16, b_p:(1, Dp) f32 (all pre-padded,
    Bp multiple of 8, Kp/Dp multiples of 128).  Returns padded (Bp, Dp) bf16.

    NOTE: padded batch rows of the output contain the bias (not zeros); they
    are sliced off by the caller and must never be reduced over.
    """
    Bp, Kp = x_p.shape
    Dp = w_p.shape[1]

    tm = _pick_tile(Bp, tm_max, 8)
    tk = _pick_tile(Kp, tk_max, 128)
    # Cover the whole output dim in one tn tile (x streamed over K exactly
    # once).  If that leaves no parallel grid axis, split N in two so v7x's
    # second TensorCore still gets work (needs Dp to be a multiple of 256).
    if Bp // tm >= 2 or Dp % 256 != 0:
        tn = Dp
    else:
        tn = Dp // 2

    grid = (Bp // tm, Dp // tn, Kp // tk)

    # Double-buffered tile footprint + accumulator, used to size scoped VMEM
    # explicitly (v5e default is only 16 MiB).
    vmem_bytes = (
        2 * (tm * tk * 4 + tk * tn * 2 + tm * tn * 2 + tn * 4)
        + tm * tn * 4
    )
    cost = pl.CostEstimate(
        flops=2 * Bp * Kp * Dp,
        transcendentals=0,
        bytes_accessed=Bp * Kp * 4 + Kp * Dp * 2 + Bp * Dp * 2 + Dp * 4,
    )
    return pl.pallas_call(
        _linear_tiled_kernel,
        out_shape=jax.ShapeDtypeStruct((Bp, Dp), jnp.bfloat16),
        grid_spec=pltpu.PrefetchScalarGridSpec(
            num_scalar_prefetch=0,
            grid=grid,
            in_specs=[
                pl.BlockSpec((tm, tk), lambda i, j, k: (i, k)),
                pl.BlockSpec((tk, tn), lambda i, j, k: (k, j)),
                pl.BlockSpec((1, tn), lambda i, j, k: (0, j)),
            ],
            out_specs=pl.BlockSpec((tm, tn), lambda i, j, k: (i, j)),
            scratch_shapes=[pltpu.VMEM((tm, tn), jnp.float32)],
        ),
        compiler_params=pltpu.CompilerParams(
            dimension_semantics=("parallel", "parallel", "arbitrary"),
            vmem_limit_bytes=_clamp_vmem_limit(vmem_bytes),
        ),
        cost_estimate=cost,
    )(x_p, w_p, b_p)


# ----------------------------------------------------------------------------
# Kernel 2: fused  mean-pool -> text linear -> concat -> classifier
#           gridded over the batch dimension, weights VMEM-resident
# ----------------------------------------------------------------------------
def _fused_text_clf_kernel(
    img_ref, tok_ref, wt_ref, bt_ref, wci_ref, wct_ref, bc_ref, o_ref,
    *, inv_seq_len
):
    # Mean-pool token embeddings: one cast + one sublane reduction + scalar
    # scale (no unrolled per-token slice-and-add).
    pooled = jnp.sum(tok_ref[...].astype(jnp.float32), axis=1) * inv_seq_len

    # synthetic clip.encode_text tail: linear(D, D) + bias (f32 epilogue)
    ocr = (
        jnp.dot(pooled.astype(jnp.bfloat16), wt_ref[...],
                preferred_element_type=jnp.float32)
        + bt_ref[...]
    )

    # classifier on torch.cat([img, ocr], 1) fused as two partial matmuls
    # against the pre-split/pre-transposed classifier weight halves.
    logits = jnp.dot(img_ref[...], wci_ref[...],
                     preferred_element_type=jnp.float32)
    logits = logits + jnp.dot(ocr.astype(jnp.bfloat16), wct_ref[...],
                              preferred_element_type=jnp.float32)
    o_ref[...] = logits + bc_ref[...]


def pallas_text_clf(img_feat_p, tok_p, txt_w_p, txt_b_p, w_img_p, w_txt_p,
                    clf_b_p, *, tb_max=64):
    """img_feat_p:(Bp, Dp) bf16, tok_p:(Bp, S, Dp) bf16, padded weights/biases
    from make_params.  Returns padded (Bp, Lp) f32 logits."""
    Bp, Dp = img_feat_p.shape
    S = tok_p.shape[1]
    Lp = clf_b_p.shape[1]

    tb = _pick_tile(Bp, tb_max, 8)
    grid = (Bp // tb,)

    vmem_bytes = 2 * (
        tb * Dp * 2 + tb * S * Dp * 2 + tb * Lp * 4
        + (Dp * Dp + 2 * Dp * Lp) * 2 + (Dp + Lp) * 4
    )
    kernel = functools.partial(_fused_text_clf_kernel, inv_seq_len=1.0 / S)

    return pl.pallas_call(
        kernel,
        out_shape=jax.ShapeDtypeStruct((Bp, Lp), jnp.float32),
        grid_spec=pltpu.PrefetchScalarGridSpec(
            num_scalar_prefetch=0,
            grid=grid,
            in_specs=[
                pl.BlockSpec((tb, Dp), lambda i: (i, 0)),       # img features
                pl.BlockSpec((tb, S, Dp), lambda i: (i, 0, 0)),  # token embeds
                pl.BlockSpec((Dp, Dp), lambda i: (0, 0)),        # txt_proj_w
                pl.BlockSpec((1, Dp), lambda i: (0, 0)),         # txt_proj_b
                pl.BlockSpec((Dp, Lp), lambda i: (0, 0)),        # clf_w_img
                pl.BlockSpec((Dp, Lp), lambda i: (0, 0)),        # clf_w_txt
                pl.BlockSpec((1, Lp), lambda i: (0, 0)),         # clf_b
            ],
            out_specs=pl.BlockSpec((tb, Lp), lambda i: (i, 0)),
        ),
        compiler_params=pltpu.CompilerParams(
            dimension_semantics=("parallel",),
            vmem_limit_bytes=_clamp_vmem_limit(vmem_bytes),
        ),
    )(img_feat_p, tok_p, txt_w_p, txt_b_p, w_img_p, w_txt_p, clf_b_p)


# ----------------------------------------------------------------------------
# Parameters: all constant padding / bf16 casting hoisted here (runs once)
# ----------------------------------------------------------------------------
def make_params(embed_dim, num_labels, img_c, img_h, img_w, vocab_size, key):
    k = jax.random.split(key, 6)
    img_in = img_c * img_h * img_w
    Kp = _round_up(img_in, 128)
    Dp = _round_up(embed_dim, 128)
    Lp = _round_up(num_labels, 128)

    def normal(kk, shape, scale):
        return jax.random.normal(kk, shape, jnp.float32) * scale

    def pad2(a, rows, cols):
        return jnp.pad(a, ((0, rows - a.shape[0]), (0, cols - a.shape[1])))

    img_w_ = normal(k[0], (img_in, embed_dim), 1.0 / jnp.sqrt(1.0 * img_in))
    img_b_ = normal(k[1], (embed_dim,), 0.01)
    tok_emb_ = normal(k[2], (vocab_size, embed_dim), 0.02)
    txt_w_ = normal(k[3], (embed_dim, embed_dim), 1.0 / jnp.sqrt(1.0 * embed_dim))
    txt_b_ = normal(k[4], (embed_dim,), 0.01)
    # self.classifier = nn.Linear(2*D, L): PyTorch (out, in) layout, split on
    # the concat boundary, transposed and padded ONCE here.
    clf_w = normal(k[5], (num_labels, 2 * embed_dim), 1.0 / jnp.sqrt(2.0 * embed_dim))
    clf_b_ = jnp.zeros((num_labels,), jnp.float32)

    params = {
        # synthetic clip.encode_image : flatten -> linear(img_in, D)
        "img_proj_w": pad2(img_w_, Kp, Dp).astype(jnp.bfloat16),
        "img_proj_b": jnp.pad(img_b_, (0, Dp - embed_dim)).reshape(1, Dp),
        # synthetic clip.encode_text : embed -> mean pool -> linear(D, D)
        "tok_emb": pad2(tok_emb_, vocab_size, Dp).astype(jnp.bfloat16),
        "txt_proj_w": pad2(txt_w_, Dp, Dp).astype(jnp.bfloat16),
        "txt_proj_b": jnp.pad(txt_b_, (0, Dp - embed_dim)).reshape(1, Dp),
        # classifier halves (D, L), bf16, padded
        "clf_w_img": pad2(jnp.transpose(clf_w[:, :embed_dim]), Dp, Lp).astype(jnp.bfloat16),
        "clf_w_txt": pad2(jnp.transpose(clf_w[:, embed_dim:]), Dp, Lp).astype(jnp.bfloat16),
        "clf_b": jnp.pad(clf_b_, (0, Lp - num_labels)).reshape(1, Lp),
    }
    return params


# ----------------------------------------------------------------------------
# CLIPClf forward (synthetic CLIP encoders + Pallas classifier)
# ----------------------------------------------------------------------------
def clip_clf_forward(params, memes, ocr, num_labels):
    """memes: (B, C, H, W) f32 NCHW.  ocr: (B, S) int32 token ids."""
    B = memes.shape[0]
    Kp, _ = params["img_proj_w"].shape
    Bp = _round_up(B, 8)   # tiles are picked from divisors of Bp -> minimal pad

    # --- clip.encode_image (synthetic): flatten NCHW -> tiled Pallas GEMM ---
    x = memes.reshape(B, -1)
    x_p = jnp.pad(x, ((0, Bp - B), (0, Kp - x.shape[1])))   # f32; cast in-kernel
    img_feat_p = pallas_linear_tiled(
        x_p, params["img_proj_w"], params["img_proj_b"]
    )  # padded (Bp, Dp) bf16; kept padded so the fused tail needs no re-pad

    # --- clip.encode_text (synthetic): embedding gather in XLA, rest fused ---
    tok = jnp.take(params["tok_emb"], ocr, axis=0)          # (B, S, Dp) bf16
    tok_p = jnp.pad(tok, ((0, Bp - B), (0, 0), (0, 0)))

    # --- mean pool + text linear + torch.cat + classifier, one gridded kernel
    logits_p = pallas_text_clf(
        img_feat_p, tok_p,
        params["txt_proj_w"], params["txt_proj_b"],
        params["clf_w_img"], params["clf_w_txt"], params["clf_b"],
    )
    return logits_p[:B, :num_labels]


# Pure-JAX reference with the same mixed precision and padded-zero weights.
def clip_clf_forward_ref(params, memes, ocr, num_labels):
    B = memes.shape[0]
    Kp, _ = params["img_proj_w"].shape
    x = memes.reshape(B, -1)
    x_p = jnp.pad(x, ((0, 0), (0, Kp - x.shape[1]))).astype(jnp.bfloat16)
    img_feat = (
        jnp.dot(x_p, params["img_proj_w"], preferred_element_type=jnp.float32)
        + params["img_proj_b"]
    ).astype(jnp.bfloat16)
    tok = jnp.take(params["tok_emb"], ocr, axis=0).astype(jnp.float32)
    pooled = jnp.mean(tok, axis=1)
    ocr_feat = (
        jnp.dot(pooled.astype(jnp.bfloat16), params["txt_proj_w"],
                preferred_element_type=jnp.float32)
        + params["txt_proj_b"]
    )
    logits = (
        jnp.dot(img_feat, params["clf_w_img"], preferred_element_type=jnp.float32)
        + jnp.dot(ocr_feat.astype(jnp.bfloat16), params["clf_w_txt"],
                  preferred_element_type=jnp.float32)
        + params["clf_b"]
    )
    return logits[:, :num_labels]


if __name__ == "__main__":
    B, C, H, W = 2, 4, 16, 16        # image batch, NCHW
    S = 8                            # ocr token sequence length
    D = 32                           # embed_dim == clip.ln_final.normalized_shape[0]
    NUM_LABELS = 4
    VOCAB = 64

    key = jax.random.PRNGKey(0)
    k_params, k_img, k_txt = jax.random.split(key, 3)

    params = make_params(D, NUM_LABELS, C, H, W, VOCAB, k_params)
    memes = jax.random.normal(k_img, (B, C, H, W), jnp.float32)
    ocr = jax.random.randint(k_txt, (B, S), 0, VOCAB, jnp.int32)

    fwd = jax.jit(functools.partial(clip_clf_forward, num_labels=NUM_LABELS))
    logits = fwd(params, memes, ocr)
    jax.block_until_ready(logits)

    ref = clip_clf_forward_ref(params, memes, ocr, NUM_LABELS)
    assert logits.shape == (B, NUM_LABELS)
    max_diff = float(jnp.max(jnp.abs(logits - ref)))
    assert jnp.allclose(logits, ref, atol=1e-2, rtol=1e-2), (
        f"mismatch vs reference: max abs diff = {max_diff}"
    )

    print("KERNEL_OK")
</pallas_src>

<mosaic_0001>
module attributes {stable_mosaic.version = 11 : i64} {
  func.func @_linear_tiled_kernel(%arg0: i32, %arg1: i32, %arg2: i32, %arg3: memref<8x1024xf32, #tpu.memory_space<vmem>>, %arg4: memref<1024x128xbf16, #tpu.memory_space<vmem>>, %arg5: memref<1x128xf32, #tpu.memory_space<vmem>>, %arg6: memref<8x128xbf16, #tpu.memory_space<vmem>>, %arg7: memref<8x128xf32, #tpu.memory_space<vmem>>) attributes {dimension_semantics = [#tpu.dimension_semantics<parallel>, #tpu.dimension_semantics<parallel>, #tpu.dimension_semantics<arbitrary>], iteration_bounds = array<i64: 1, 1, 1>, scalar_prefetch = 0 : i64, scratch_operands = 1 : i64, tpu.core_type = #tpu.core_type<tc>, window_params = [{transform_indices = @transform_0, window_bounds = array<i64: 8, 1024>}, {transform_indices = @transform_1, window_bounds = array<i64: 1024, 128>}, {transform_indices = @transform_2, window_bounds = array<i64: 1, 128>}, {transform_indices = @transform_3, window_bounds = array<i64: 8, 128>}]} {
    %c0_i32 = arith.constant 0 : i32
    %0 = arith.cmpi eq, %arg2, %c0_i32 : i32
    %1 = arith.extui %0 : i1 to i32
    %c0_i32_0 = arith.constant 0 : i32
    %2 = arith.cmpi ne, %1, %c0_i32_0 : i32
    scf.if %2 {
      %cst_10 = arith.constant 0.000000e+00 : f32
      %13 = vector.broadcast %cst_10 : f32 to vector<8x128xf32>
      %c0_11 = arith.constant 0 : index
      %c0_12 = arith.constant 0 : index
      %14 = vector.load %arg7[%c0_11, %c0_12] : memref<8x128xf32, #tpu.memory_space<vmem>>, vector<8x128xf32>
      tpu.vector_store %arg7[%c0_11, %c0_12], %13 {strides = array<i32>} : memref<8x128xf32, #tpu.memory_space<vmem>>, vector<8x128xf32>,
    } else {
    }
    %c0 = arith.constant 0 : index
    %c0_1 = arith.constant 0 : index
    %3 = vector.load %arg7[%c0, %c0_1] : memref<8x128xf32, #tpu.memory_space<vmem>>, vector<8x128xf32>
    %c0_2 = arith.constant 0 : index
    %c0_3 = arith.constant 0 : index
    %4 = vector.load %arg3[%c0_2, %c0_3] : memref<8x1024xf32, #tpu.memory_space<vmem>>, vector<8x1024xf32>
    %5 = arith.truncf %4 : vector<8x1024xf32> to vector<8x1024xbf16>
    %c0_4 = arith.constant 0 : index
    %c0_5 = arith.constant 0 : index
    %6 = vector.load %arg4[%c0_4, %c0_5] : memref<1024x128xbf16, #tpu.memory_space<vmem>>, vector<1024x128xbf16>
    %cst = arith.constant dense<0.000000e+00> : vector<8x128xf32>
    %7 = tpu.matmul %5, %6, %cst {dimension_numbers = #tpu.dot_dimension_numbers<[1], [0], [0], [1], [0, 0, 1, 1], [], []>} : vector<8x1024xbf16>, vector<1024x128xbf16>, vector<8x128xf32> -> vector<8x128xf32>
    %8 = arith.addf %3, %7 : vector<8x128xf32>
    %c0_6 = arith.constant 0 : index
    %c0_7 = arith.constant 0 : index
    %9 = vector.load %arg7[%c0_6, %c0_7] : memref<8x128xf32, #tpu.memory_space<vmem>>, vector<8x128xf32>
    tpu.vector_store %arg7[%c0_6, %c0_7], %8 {strides = array<i32>} : memref<8x128xf32, #tpu.memory_space<vmem>>, vector<8x128xf32>,
    %c0_i32_8 = arith.constant 0 : i32
    %10 = arith.cmpi eq, %arg2, %c0_i32_8 : i32
    %11 = arith.extui %10 : i1 to i32
    %c0_i32_9 = arith.constant 0 : i32
    %12 = arith.cmpi ne, %11, %c0_i32_9 : i32
    scf.if %12 {
      %c0_10 = arith.constant 0 : index
      %c0_11 = arith.constant 0 : index
      %13 = vector.load %arg7[%c0_10, %c0_11] : memref<8x128xf32, #tpu.memory_space<vmem>>, vector<8x128xf32>
      %c0_12 = arith.constant 0 : index
      %c0_13 = arith.constant 0 : index
      %14 = vector.load %arg5[%c0_12, %c0_13] : memref<1x128xf32, #tpu.memory_space<vmem>>, vector<1x128xf32>
      %15 = vector.broadcast %14 : vector<1x128xf32> to vector<8x128xf32>
      %16 = arith.addf %13, %15 : vector<8x128xf32>
      %17 = arith.truncf %16 : vector<8x128xf32> to vector<8x128xbf16>
      %c0_14 = arith.constant 0 : index
      %c0_15 = arith.constant 0 : index
      %18 = vector.load %arg6[%c0_14, %c0_15] : memref<8x128xbf16, #tpu.memory_space<vmem>>, vector<8x128xbf16>
      tpu.vector_store %arg6[%c0_14, %c0_15], %17 {strides = array<i32>} : memref<8x128xbf16, #tpu.memory_space<vmem>>, vector<8x128xbf16>,
    } else {
    }
    return
  }
  func.func @transform_0(%arg0: i32, %arg1: i32, %arg2: i32) -> (i32, i32) {
    %c0_i32 = arith.constant 0 : i32
    return %arg0, %arg2 : i32, i32
  }
  func.func @transform_1(%arg0: i32, %arg1: i32, %arg2: i32) -> (i32, i32) {
    %c0_i32 = arith.constant 0 : i32
    return %arg2, %arg1 : i32, i32
  }
  func.func @transform_2(%arg0: i32, %arg1: i32, %arg2: i32) -> (i32, i32) {
    %c0_i32 = arith.constant 0 : i32
    %c0_i32_0 = arith.constant 0 : i32
    return %c0_i32, %arg1 : i32, i32
  }
  func.func @transform_3(%arg0: i32, %arg1: i32, %arg2: i32) -> (i32, i32) {
    %c0_i32 = arith.constant 0 : i32
    return %arg0, %arg1 : i32, i32
  }
}

module attributes {stable_mosaic.version = 11 : i64} {
  func.func @_fused_text_clf_kernel(%arg0: i32, %arg1: memref<8x128xbf16, #tpu.memory_space<vmem>>, %arg2: memref<8x8x128xbf16, #tpu.memory_space<vmem>>, %arg3: memref<128x128xbf16, #tpu.memory_space<vmem>>, %arg4: memref<1x128xf32, #tpu.memory_space<vmem>>, %arg5: memref<128x128xbf16, #tpu.memory_space<vmem>>, %arg6: memref<128x128xbf16, #tpu.memory_space<vmem>>, %arg7: memref<1x128xf32, #tpu.memory_space<vmem>>, %arg8: memref<8x128xf32, #tpu.memory_space<vmem>>) attributes {dimension_semantics = [#tpu.dimension_semantics<parallel>], iteration_bounds = array<i64: 1>, scalar_prefetch = 0 : i64, scratch_operands = 0 : i64, tpu.core_type = #tpu.core_type<tc>, window_params = [{transform_indices = @transform_0, window_bounds = array<i64: 8, 128>}, {transform_indices = @transform_1, window_bounds = array<i64: 8, 8, 128>}, {pipeline_mode = #tpu.pipeline_mode<synchronous>, transform_indices = @transform_2, window_bounds = array<i64: 128, 128>}, {pipeline_mode = #tpu.pipeline_mode<synchronous>, transform_indices = @transform_3, window_bounds = array<i64: 1, 128>}, {pipeline_mode = #tpu.pipeline_mode<synchronous>, transform_indices = @transform_4, window_bounds = array<i64: 128, 128>}, {pipeline_mode = #tpu.pipeline_mode<synchronous>, transform_indices = @transform_5, window_bounds = array<i64: 128, 128>}, {pipeline_mode = #tpu.pipeline_mode<synchronous>, transform_indices = @transform_6, window_bounds = array<i64: 1, 128>}, {transform_indices = @transform_7, window_bounds = array<i64: 8, 128>}]} {
    %c0 = arith.constant 0 : index
    %c0_0 = arith.constant 0 : index
    %c0_1 = arith.constant 0 : index
    %0 = vector.load %arg2[%c0, %c0_0, %c0_1] : memref<8x8x128xbf16, #tpu.memory_space<vmem>>, vector<8x8x128xbf16>
    %1 = arith.extf %0 : vector<8x8x128xbf16> to vector<8x8x128xf32>
    %cst = arith.constant dense<0.000000e+00> : vector<8x128xf32>
    %2 = vector.multi_reduction <add>, %1, %cst [1] : vector<8x8x128xf32> to vector<8x128xf32>
    %cst_2 = arith.constant 1.250000e-01 : f32
    %3 = vector.broadcast %cst_2 : f32 to vector<8x128xf32>
    %4 = arith.mulf %2, %3 : vector<8x128xf32>
    %5 = arith.truncf %4 : vector<8x128xf32> to vector<8x128xbf16>
    %c0_3 = arith.constant 0 : index
    %c0_4 = arith.constant 0 : index
    %6 = vector.load %arg3[%c0_3, %c0_4] : memref<128x128xbf16, #tpu.memory_space<vmem>>, vector<128x128xbf16>
    %cst_5 = arith.constant dense<0.000000e+00> : vector<8x128xf32>
    %7 = tpu.matmul %5, %6, %cst_5 {dimension_numbers = #tpu.dot_dimension_numbers<[1], [0], [0], [1], [0, 0, 1, 1], [], []>} : vector<8x128xbf16>, vector<128x128xbf16>, vector<8x128xf32> -> vector<8x128xf32>
    %c0_6 = arith.constant 0 : index
    %c0_7 = arith.constant 0 : index
    %8 = vector.load %arg4[%c0_6, %c0_7] : memref<1x128xf32, #tpu.memory_space<vmem>>, vector<1x128xf32>
    %9 = vector.broadcast %8 : vector<1x128xf32> to vector<8x128xf32>
    %10 = arith.addf %7, %9 : vector<8x128xf32>
    %c0_8 = arith.constant 0 : index
    %c0_9 = arith.constant 0 : index
    %11 = vector.load %arg1[%c0_8, %c0_9] : memref<8x128xbf16, #tpu.memory_space<vmem>>, vector<8x128xbf16>
    %c0_10 = arith.constant 0 : index
    %c0_11 = arith.constant 0 : index
    %12 = vector.load %arg5[%c0_10, %c0_11] : memref<128x128xbf16, #tpu.memory_space<vmem>>, vector<128x128xbf16>
    %cst_12 = arith.constant dense<0.000000e+00> : vector<8x128xf32>
    %13 = tpu.matmul %11, %12, %cst_12 {dimension_numbers = #tpu.dot_dimension_numbers<[1], [0], [0], [1], [0, 0, 1, 1], [], []>} : vector<8x128xbf16>, vector<128x128xbf16>, vector<8x128xf32> -> vector<8x128xf32>
    %14 = arith.truncf %10 : vector<8x128xf32> to vector<8x128xbf16>
    %c0_13 = arith.constant 0 : index
    %c0_14 = arith.constant 0 : index
    %15 = vector.load %arg6[%c0_13, %c0_14] : memref<128x128xbf16, #tpu.memory_space<vmem>>, vector<128x128xbf16>
    %cst_15 = arith.constant dense<0.000000e+00> : vector<8x128xf32>
    %16 = tpu.matmul %14, %15, %cst_15 {dimension_numbers = #tpu.dot_dimension_numbers<[1], [0], [0], [1], [0, 0, 1, 1], [], []>} : vector<8x128xbf16>, vector<128x128xbf16>, vector<8x128xf32> -> vector<8x128xf32>
    %17 = arith.addf %13, %16 : vector<8x128xf32>
    %c0_16 = arith.constant 0 : index
    %c0_17 = arith.constant 0 : index
    %18 = vector.load %arg7[%c0_16, %c0_17] : memref<1x128xf32, #tpu.memory_space<vmem>>, vector<1x128xf32>
    %19 = vector.broadcast %18 : vector<1x128xf32> to vector<8x128xf32>
    %20 = arith.addf %17, %19 : vector<8x128xf32>
    %c0_18 = arith.constant 0 : index
    %c0_19 = arith.constant 0 : index
    %21 = vector.load %arg8[%c0_18, %c0_19] : memref<8x128xf32, #tpu.memory_space<vmem>>, vector<8x128xf32>
    tpu.vector_store %arg8[%c0_18, %c0_19], %20 {strides = array<i32>} : memref<8x128xf32, #tpu.memory_space<vmem>>, vector<8x128xf32>,
    return
  }
  func.func @transform_0(%arg0: i32) -> (i32, i32) {
    %c0_i32 = arith.constant 0 : i32
    %c0_i32_0 = arith.constant 0 : i32
    return %arg0, %c0_i32 : i32, i32
  }
  func.func @transform_1(%arg0: i32) -> (i32, i32, i32) {
    %c0_i32 = arith.constant 0 : i32
    %c0_i32_0 = arith.constant 0 : i32
    %c0_i32_1 = arith.constant 0 : i32
    return %arg0, %c0_i32, %c0_i32_0 : i32, i32, i32
  }
  func.func @transform_2(%arg0: i32) -> (i32, i32) {
    %c0_i32 = arith.constant 0 : i32
    %c0_i32_0 = arith.constant 0 : i32
    %c0_i32_1 = arith.constant 0 : i32
    return %c0_i32, %c0_i32_0 : i32, i32
  }
  func.func @transform_3(%arg0: i32) -> (i32, i32) {
    %c0_i32 = arith.constant 0 : i32
    %c0_i32_0 = arith.constant 0 : i32
    %c0_i32_1 = arith.constant 0 : i32
    return %c0_i32, %c0_i32_0 : i32, i32
  }
  func.func @transform_4(%arg0: i32) -> (i32, i32) {
    %c0_i32 = arith.constant 0 : i32
    %c0_i32_0 = arith.constant 0 : i32
    %c0_i32_1 = arith.constant 0 : i32
    return %c0_i32, %c0_i32_0 : i32, i32
  }
  func.func @transform_5(%arg0: i32) -> (i32, i32) {
    %c0_i32 = arith.constant 0 : i32
    %c0_i32_0 = arith.constant 0 : i32
    %c0_i32_1 = arith.constant 0 : i32
    return %c0_i32, %c0_i32_0 : i32, i32
  }
  func.func @transform_6(%arg0: i32) -> (i32, i32) {
    %c0_i32 = arith.constant 0 : i32
    %c0_i32_0 = arith.constant 0 : i32
    %c0_i32_1 = arith.constant 0 : i32
    return %c0_i32, %c0_i32_0 : i32, i32
  }
  func.func @transform_7(%arg0: i32) -> (i32, i32) {
    %c0_i32 = arith.constant 0 : i32
    %c0_i32_0 = arith.constant 0 : i32
    return %arg0, %c0_i32 : i32, i32
  }
}

</mosaic_0001>

<llo_original>
// kernel: clip_clf_forward.2
$region0: #{clip_clf_forward.2}
  #allocation0 [shape = 'u32[]', space=smem, size = 0x4, offset = 0x4, fixed_abs, tag = 'smem constant byte address 0x4 - core index']
  #allocation1 [shape = 'u32[144,128]{1,0:T(1,128)}', space=vmem, size = 0x12000, scoped, tag = 'internal scratch']
  #allocation2 [shape = 'f32[8,128]{1,0:T(8,128)}', space=vmem, size = 0x1000, scoped, tag = 'scratch operand']
  %s0 = inlined_call_operand.vmem [shape: f32[8,1024], index: 0, kind: input, shape index: {}]
  %s1 = inlined_call_operand.hbm [shape: bf16[1024,128], index: 1, kind: input, shape index: {}]
  %s2 = inlined_call_operand.vmem [shape: f32[1,128], index: 2, kind: input, shape index: {}]
  %s3 = inlined_call_operand.vmem [shape: bf16[8,128], index: 3, kind: output, shape index: {}]
  %s4 = sld [smem:[#allocation0]]
  $region34: #{clip_clf_forward.2} parent=0
    _
  %s6 = ssub.s32 1, %s4
  %s7 = scalar_select 0, %s6, %s4
  $region1: #{clip_clf_forward.2} parent=0
    #allocation3 [shape = 'u8[262144]{0}', space=vmem, size = 0x40000, scoped, tag = 'input window, operand 1, single buffered']
    #allocation4 [shape = 's32[1]{0}', space=sflag, size = 0x4, scoped, tag = 'scoped memory for clip_clf_forward.2']
    %8 = vsyncpa [#allocation4], 0
    // Predicated region
    $region2: #{clip_clf_forward.2} parent=1 // pred_check
      _
    $region3: #{clip_clf_forward.2} parent=1 // pred_check_branch
      %10 = sbr.rel (0) target = $region5
    $region4: #{clip_clf_forward.2} parent=1 // pred_region
      _
    $region5: #{clip_clf_forward.2} parent=1 // pred_fallthru
      _
    // Predicated region
    $region6: #{clip_clf_forward.2} parent=1 // pred_check
      _
    $region7: #{clip_clf_forward.2} parent=1 // pred_check_branch
      %12 = sbr.rel (0) target = $region9
    $region8: #{clip_clf_forward.2} parent=1 // pred_region
      %s14 = ssub.s32 8192, 8192
      %15 = vsyncadd [#allocation4], %s14
      %s16 = sshll.u32 [#allocation3], 4
      %s17 = int_to_ptr.vmem [resolvable:$true] %s16
      %22 = dma.hbm_to_vmem [thread:$0]  %s1, 8192, %s17, [#allocation4], 64, 64, 4
    $region9: #{clip_clf_forward.2} parent=1 // pred_fallthru
      _
    // Predicated region
    $region10: #{clip_clf_forward.2} parent=1 // pred_check
      _
    $region11: #{clip_clf_forward.2} parent=1 // pred_check_branch
      %24 = sbr.rel (0) target = $region13
    $region12: #{clip_clf_forward.2} parent=1 // pred_region
      _
    $region13: #{clip_clf_forward.2} parent=1 // pred_fallthru
      _
    // Predicated region
    $region14: #{clip_clf_forward.2} parent=1 // pred_check
      _
    $region15: #{clip_clf_forward.2} parent=1 // pred_check_branch
      %26 = sbr.rel (0) target = $region17
    $region16: #{clip_clf_forward.2} parent=1 // pred_region
      %27 = dma.done [#allocation4], 8192
    $region17: #{clip_clf_forward.2} parent=1 // pred_fallthru
      _
    %p29 = scmp.eq.s32.totalorder 0, 0
    // Predicated region
    $region18: #{clip_clf_forward.2} parent=1 // pred_check
      %p30 = pneg %p29
    $region19: #{clip_clf_forward.2} parent=1 // pred_check_branch
      %32 = sbr.rel (%p30) target = $region21
    $region20: #{clip_clf_forward.2} parent=1 // pred_region
      %33 = vst [vmem:[#allocation2] sm:$0xff] 0.0
    $region21: #{clip_clf_forward.2} parent=1 // pred_fallthru
      _
    %v34 = vld [vmem:[#allocation2] sm:$0xff]
    %v35 = vld [vmem:[%s0] sm:$0xff]
    %v36 = vld [vmem:[%s0 + $0x8] sm:$0xff]
    %v37 = vld [vmem:[%s0 + $0x10] sm:$0xff]
    %v38 = vld [vmem:[%s0 + $0x18] sm:$0xff]
    %v39 = vld [vmem:[%s0 + $0x20] sm:$0xff]
    %v40 = vld [vmem:[%s0 + $0x28] sm:$0xff]
    %v41 = vld [vmem:[%s0 + $0x30] sm:$0xff]
    %v42 = vld [vmem:[%s0 + $0x38] sm:$0xff]
    %v43 = vpack.c.bf16 %v35, %v35
    %v44 = vpack.c.bf16 %v36, %v36
    %v45 = vpack.c.bf16 %v37, %v37
    %v46 = vpack.c.bf16 %v38, %v38
    %v47 = vpack.c.bf16 %v39, %v39
    %v48 = vpack.c.bf16 %v40, %v40
    %v49 = vpack.c.bf16 %v41, %v41
    %v50 = vpack.c.bf16 %v42, %v42
    %v51 = vld [vmem:[#allocation3] sm:$0xf]
    %v52 = vld [vmem:[#allocation3 + $0x4] sm:$0xf]
    %v53 = vld [vmem:[#allocation3 + $0x8] sm:$0xf]
    %v54 = vld [vmem:[#allocation3 + $0xc] sm:$0xf]
    %v55 = vld [vmem:[#allocation3 + $0x10] sm:$0xf]
    %v56 = vld [vmem:[#allocation3 + $0x14] sm:$0xf]
    %v57 = vld [vmem:[#allocation3 + $0x18] sm:$0xf]
    %v58 = vld [vmem:[#allocation3 + $0x1c] sm:$0xf]
    %v59 = vld [vmem:[#allocation3 + $0x20] sm:$0xf]
    %v60 = vld [vmem:[#allocation3 + $0x24] sm:$0xf]
    %v61 = vld [vmem:[#allocation3 + $0x28] sm:$0xf]
    %v62 = vld [vmem:[#allocation3 + $0x2c] sm:$0xf]
    %v63 = vld [vmem:[#allocation3 + $0x30] sm:$0xf]
    %v64 = vld [vmem:[#allocation3 + $0x34] sm:$0xf]
    %v65 = vld [vmem:[#allocation3 + $0x38] sm:$0xf]
    %v66 = vld [vmem:[#allocation3 + $0x3c] sm:$0xf]
    %v67 = vld [vmem:[#allocation3 + $0x40] sm:$0xf]
    %v68 = vld [vmem:[#allocation3 + $0x44] sm:$0xf]
    %v69 = vld [vmem:[#allocation3 + $0x48] sm:$0xf]
    %v70 = vld [vmem:[#allocation3 + $0x4c] sm:$0xf]
    %v71 = vld [vmem:[#allocation3 + $0x50] sm:$0xf]
    %v72 = vld [vmem:[#allocation3 + $0x54] sm:$0xf]
    %v73 = vld [vmem:[#allocation3 + $0x58] sm:$0xf]
    %v74 = vld [vmem:[#allocation3 + $0x5c] sm:$0xf]
    %v75 = vld [vmem:[#allocation3 + $0x60] sm:$0xf]
    %v76 = vld [vmem:[#allocation3 + $0x64] sm:$0xf]
    %v77 = vld [vmem:[#allocation3 + $0x68] sm:$0xf]
    %v78 = vld [vmem:[#allocation3 + $0x6c] sm:$0xf]
    %v79 = vld [vmem:[#allocation3 + $0x70] sm:$0xf]
    %v80 = vld [vmem:[#allocation3 + $0x74] sm:$0xf]
    %v81 = vld [vmem:[#allocation3 + $0x78] sm:$0xf]
    %v82 = vld [vmem:[#allocation3 + $0x7c] sm:$0xf]
    %v83 = vld [vmem:[#allocation3 + $0x80] sm:$0xf]
    %v84 = vld [vmem:[#allocation3 + $0x84] sm:$0xf]
    %v85 = vld [vmem:[#allocation3 + $0x88] sm:$0xf]
    %v86 = vld [vmem:[#allocation3 + $0x8c] sm:$0xf]
    %v87 = vld [vmem:[#allocation3 + $0x90] sm:$0xf]
    %v88 = vld [vmem:[#allocation3 + $0x94] sm:$0xf]
    %v89 = vld [vmem:[#allocation3 + $0x98] sm:$0xf]
    %v90 = vld [vmem:[#allocation3 + $0x9c] sm:$0xf]
    %v91 = vld [vmem:[#allocation3 + $0xa0] sm:$0xf]
    %v92 = vld [vmem:[#allocation3 + $0xa4] sm:$0xf]
    %v93 = vld [vmem:[#allocation3 + $0xa8] sm:$0xf]
    %v94 = vld [vmem:[#allocation3 + $0xac] sm:$0xf]
    %v95 = vld [vmem:[#allocation3 + $0xb0] sm:$0xf]
    %v96 = vld [vmem:[#allocation3 + $0xb4] sm:$0xf]
    %v97 = vld [vmem:[#allocation3 + $0xb8] sm:$0xf]
    %v98 = vld [vmem:[#allocation3 + $0xbc] sm:$0xf]
    %v99 = vld [vmem:[#allocation3 + $0xc0] sm:$0xf]
    %v100 = vld [vmem:[#allocation3 + $0xc4] sm:$0xf]
    %v101 = vld [vmem:[#allocation3 + $0xc8] sm:$0xf]
    %v102 = vld [vmem:[#allocation3 + $0xcc] sm:$0xf]
    %v103 = vld [vmem:[#allocation3 + $0xd0] sm:$0xf]
    %v104 = vld [vmem:[#allocation3 + $0xd4] sm:$0xf]
    %v105 = vld [vmem:[#allocation3 + $0xd8] sm:$0xf]
    %v106 = vld [vmem:[#allocation3 + $0xdc] sm:$0xf]
    %v107 = vld [vmem:[#allocation3 + $0xe0] sm:$0xf]
    %v108 = vld [vmem:[#allocation3 + $0xe4] sm:$0xf]
    %v109 = vld [vmem:[#allocation3 + $0xe8] sm:$0xf]
    %v110 = vld [vmem:[#allocation3 + $0xec] sm:$0xf]
    %v111 = vld [vmem:[#allocation3 + $0xf0] sm:$0xf]
    %v112 = vld [vmem:[#allocation3 + $0xf4] sm:$0xf]
    %v113 = vld [vmem:[#allocation3 + $0xf8] sm:$0xf]
    %v114 = vld [vmem:[#allocation3 + $0xfc] sm:$0xf]
    %v115 = vld [vmem:[#allocation3 + $0x100] sm:$0xf]
    %v116 = vld [vmem:[#allocation3 + $0x104] sm:$0xf]
    %v117 = vld [vmem:[#allocation3 + $0x108] sm:$0xf]
    %v118 = vld [vmem:[#allocation3 + $0x10c] sm:$0xf]
    %v119 = vld [vmem:[#allocation3 + $0x110] sm:$0xf]
    %v120 = vld [vmem:[#allocation3 + $0x114] sm:$0xf]
    %v121 = vld [vmem:[#allocation3 + $0x118] sm:$0xf]
    %v122 = vld [vmem:[#allocation3 + $0x11c] sm:$0xf]
    %v123 = vld [vmem:[#allocation3 + $0x120] sm:$0xf]
    %v124 = vld [vmem:[#allocation3 + $0x124] sm:$0xf]
    %v125 = vld [vmem:[#allocation3 + $0x128] sm:$0xf]
    %v126 = vld [vmem:[#allocation3 + $0x12c] sm:$0xf]
    %v127 = vld [vmem:[#allocation3 + $0x130] sm:$0xf]
    %v128 = vld [vmem:[#allocation3 + $0x134] sm:$0xf]
    %v129 = vld [vmem:[#allocation3 + $0x138] sm:$0xf]
    %v130 = vld [vmem:[#allocation3 + $0x13c] sm:$0xf]
    %v131 = vld [vmem:[#allocation3 + $0x140] sm:$0xf]
    %v132 = vld [vmem:[#allocation3 + $0x144] sm:$0xf]
    %v133 = vld [vmem:[#allocation3 + $0x148] sm:$0xf]
    %v134 = vld [vmem:[#allocation3 + $0x14c] sm:$0xf]
    %v135 = vld [vmem:[#allocation3 + $0x150] sm:$0xf]
    %v136 = vld [vmem:[#allocation3 + $0x154] sm:$0xf]
    %v137 = vld [vmem:[#allocation3 + $0x158] sm:$0xf]
    %v138 = vld [vmem:[#allocation3 + $0x15c] sm:$0xf]
    %v139 = vld [vmem:[#allocation3 + $0x160] sm:$0xf]
    %v140 = vld [vmem:[#allocation3 + $0x164] sm:$0xf]
    %v141 = vld [vmem:[#allocation3 + $0x168] sm:$0xf]
    %v142 = vld [vmem:[#allocation3 + $0x16c] sm:$0xf]
    %v143 = vld [vmem:[#allocation3 + $0x170] sm:$0xf]
    %v144 = vld [vmem:[#allocation3 + $0x174] sm:$0xf]
    %v145 = vld [vmem:[#allocation3 + $0x178] sm:$0xf]
    %v146 = vld [vmem:[#allocation3 + $0x17c] sm:$0xf]
    %v147 = vld [vmem:[#allocation3 + $0x180] sm:$0xf]
    %v148 = vld [vmem:[#allocation3 + $0x184] sm:$0xf]
    %v149 = vld [vmem:[#allocation3 + $0x188] sm:$0xf]
    %v150 = vld [vmem:[#allocation3 + $0x18c] sm:$0xf]
    %v151 = vld [vmem:[#allocation3 + $0x190] sm:$0xf]
    %v152 = vld [vmem:[#allocation3 + $0x194] sm:$0xf]
    %v153 = vld [vmem:[#allocation3 + $0x198] sm:$0xf]
    %v154 = vld [vmem:[#allocation3 + $0x19c] sm:$0xf]
    %v155 = vld [vmem:[#allocation3 + $0x1a0] sm:$0xf]
    %v156 = vld [vmem:[#allocation3 + $0x1a4] sm:$0xf]
    %v157 = vld [vmem:[#allocation3 + $0x1a8] sm:$0xf]
    %v158 = vld [vmem:[#allocation3 + $0x1ac] sm:$0xf]
    %v159 = vld [vmem:[#allocation3 + $0x1b0] sm:$0xf]
    %v160 = vld [vmem:[#allocation3 + $0x1b4] sm:$0xf]
    %v161 = vld [vmem:[#allocation3 + $0x1b8] sm:$0xf]
    %v162 = vld [vmem:[#allocation3 + $0x1bc] sm:$0xf]
    %v163 = vld [vmem:[#allocation3 + $0x1c0] sm:$0xf]
    %v164 = vld [vmem:[#allocation3 + $0x1c4] sm:$0xf]
    %v165 = vld [vmem:[#allocation3 + $0x1c8] sm:$0xf]
    %v166 = vld [vmem:[#allocation3 + $0x1cc] sm:$0xf]
    %v167 = vld [vmem:[#allocation3 + $0x1d0] sm:$0xf]
    %v168 = vld [vmem:[#allocation3 + $0x1d4] sm:$0xf]
    %v169 = vld [vmem:[#allocation3 + $0x1d8] sm:$0xf]
    %v170 = vld [vmem:[#allocation3 + $0x1dc] sm:$0xf]
    %v171 = vld [vmem:[#allocation3 + $0x1e0] sm:$0xf]
    %v172 = vld [vmem:[#allocation3 + $0x1e4] sm:$0xf]
    %v173 = vld [vmem:[#allocation3 + $0x1e8] sm:$0xf]
    %v174 = vld [vmem:[#allocation3 + $0x1ec] sm:$0xf]
    %v175 = vld [vmem:[#allocation3 + $0x1f0] sm:$0xf]
    %v176 = vld [vmem:[#allocation3 + $0x1f4] sm:$0xf]
    %v177 = vld [vmem:[#allocation3 + $0x1f8] sm:$0xf]
    %v178 = vld [vmem:[#allocation3 + $0x1fc] sm:$0xf]
    %v307 = vunpack.c.l.b16 %v51
    %v308 = vunpack.c.l.b16 %v52
    %v309 = vunpack.c.l.b16 %v53
    %v310 = vunpack.c.l.b16 %v54
    %v311 = vunpack.c.l.b16 %v55
    %v312 = vunpack.c.l.b16 %v56
    %v313 = vunpack.c.l.b16 %v57
    %v314 = vunpack.c.l.b16 %v58
    %v315 = vunpack.c.l.b16 %v59
    %v316 = vunpack.c.l.b16 %v60
    %v317 = vunpack.c.l.b16 %v61
    %v318 = vunpack.c.l.b16 %v62
    %v319 = vunpack.c.l.b16 %v63
    %v320 = vunpack.c.l.b16 %v64
    %v321 = vunpack.c.l.b16 %v65
    %v322 = vunpack.c.l.b16 %v66
    %v323 = vunpack.c.l.b16 %v67
    %v324 = vunpack.c.l.b16 %v68
    %v325 = vunpack.c.l.b16 %v69
    %v326 = vunpack.c.l.b16 %v70
    %v327 = vunpack.c.l.b16 %v71
    %v328 = vunpack.c.l.b16 %v72
    %v329 = vunpack.c.l.b16 %v73
    %v330 = vunpack.c.l.b16 %v74
    %v331 = vunpack.c.l.b16 %v75
    %v332 = vunpack.c.l.b16 %v76
    %v333 = vunpack.c.l.b16 %v77
    %v334 = vunpack.c.l.b16 %v78
    %v335 = vunpack.c.l.b16 %v79
    %v336 = vunpack.c.l.b16 %v80
    %v337 = vunpack.c.l.b16 %v81
    %v338 = vunpack.c.l.b16 %v82
    %v339 = vunpack.c.l.b16 %v83
    %v340 = vunpack.c.l.b16 %v84
    %v341 = vunpack.c.l.b16 %v85
    %v342 = vunpack.c.l.b16 %v86
    %v343 = vunpack.c.l.b16 %v87
    %v344 = vunpack.c.l.b16 %v88
    %v345 = vunpack.c.l.b16 %v89
    %v346 = vunpack.c.l.b16 %v90
    %v347 = vunpack.c.l.b16 %v91
    %v348 = vunpack.c.l.b16 %v92
    %v349 = vunpack.c.l.b16 %v93
    %v350 = vunpack.c.l.b16 %v94
    %v351 = vunpack.c.l.b16 %v95
    %v352 = vunpack.c.l.b16 %v96
    %v353 = vunpack.c.l.b16 %v97
    %v354 = vunpack.c.l.b16 %v98
    %v355 = vunpack.c.l.b16 %v99
    %v356 = vunpack.c.l.b16 %v100
    %v357 = vunpack.c.l.b16 %v101
    %v358 = vunpack.c.l.b16 %v102
    %v359 = vunpack.c.l.b16 %v103
    %v360 = vunpack.c.l.b16 %v104
    %v361 = vunpack.c.l.b16 %v105
    %v362 = vunpack.c.l.b16 %v106
    %v363 = vunpack.c.l.b16 %v107
    %v364 = vunpack.c.l.b16 %v108
    %v365 = vunpack.c.l.b16 %v109
    %v366 = vunpack.c.l.b16 %v110
    %v367 = vunpack.c.l.b16 %v111
    %v368 = vunpack.c.l.b16 %v112
    %v369 = vunpack.c.l.b16 %v113
    %v370 = vunpack.c.l.b16 %v114
    %v371 = vunpack.c.l.b16 %v115
    %v372 = vunpack.c.l.b16 %v116
    %v373 = vunpack.c.l.b16 %v117
    %v374 = vunpack.c.l.b16 %v118
    %v375 = vunpack.c.l.b16 %v119
    %v376 = vunpack.c.l.b16 %v120
    %v377 = vunpack.c.l.b16 %v121
    %v378 = vunpack.c.l.b16 %v122
    %v379 = vunpack.c.l.b16 %v123
    %v380 = vunpack.c.l.b16 %v124
    %v381 = vunpack.c.l.b16 %v125
    %v382 = vunpack.c.l.b16 %v126
    %v383 = vunpack.c.l.b16 %v127
    %v384 = vunpack.c.l.b16 %v128
    %v385 = vunpack.c.l.b16 %v129
    %v386 = vunpack.c.l.b16 %v130
    %v387 = vunpack.c.l.b16 %v131
    %v388 = vunpack.c.l.b16 %v132
    %v389 = vunpack.c.l.b16 %v133
    %v390 = vunpack.c.l.b16 %v134
    %v391 = vunpack.c.l.b16 %v135
    %v392 = vunpack.c.l.b16 %v136
    %v393 = vunpack.c.l.b16 %v137
    %v394 = vunpack.c.l.b16 %v138
    %v395 = vunpack.c.l.b16 %v139
    %v396 = vunpack.c.l.b16 %v140
    %v397 = vunpack.c.l.b16 %v141
    %v398 = vunpack.c.l.b16 %v142
    %v399 = vunpack.c.l.b16 %v143
    %v400 = vunpack.c.l.b16 %v144
    %v401 = vunpack.c.l.b16 %v145
    %v402 = vunpack.c.l.b16 %v146
    %v403 = vunpack.c.l.b16 %v147
    %v404 = vunpack.c.l.b16 %v148
    %v405 = vunpack.c.l.b16 %v149
    %v406 = vunpack.c.l.b16 %v150
    %v407 = vunpack.c.l.b16 %v151
    %v408 = vunpack.c.l.b16 %v152
    %v409 = vunpack.c.l.b16 %v153
    %v410 = vunpack.c.l.b16 %v154
    %v411 = vunpack.c.l.b16 %v155
    %v412 = vunpack.c.l.b16 %v156
    %v413 = vunpack.c.l.b16 %v157
    %v414 = vunpack.c.l.b16 %v158
    %v415 = vunpack.c.l.b16 %v159
    %v416 = vunpack.c.l.b16 %v160
    %v417 = vunpack.c.l.b16 %v161
    %v418 = vunpack.c.l.b16 %v162
    %v419 = vunpack.c.l.b16 %v163
    %v420 = vunpack.c.l.b16 %v164
    %v421 = vunpack.c.l.b16 %v165
    %v422 = vunpack.c.l.b16 %v166
    %v423 = vunpack.c.l.b16 %v167
    %v424 = vunpack.c.l.b16 %v168
    %v425 = vunpack.c.l.b16 %v169
    %v426 = vunpack.c.l.b16 %v170
    %v427 = vunpack.c.l.b16 %v171
    %v428 = vunpack.c.l.b16 %v172
    %v429 = vunpack.c.l.b16 %v173
    %v430 = vunpack.c.l.b16 %v174
    %v431 = vunpack.c.l.b16 %v175
    %v432 = vunpack.c.l.b16 %v176
    %v433 = vunpack.c.l.b16 %v177
    %v434 = vunpack.c.l.b16 %v178
    %v435 = vpack.c.b16 %v308, %v307
    %v436 = vpack.c.b16 %v310, %v309
    %v437 = vpack.c.b16 %v312, %v311
    %v438 = vpack.c.b16 %v314, %v313
    %v439 = vpack.c.b16 %v316, %v315
    %v440 = vpack.c.b16 %v318, %v317
    %v441 = vpack.c.b16 %v320, %v319
    %v442 = vpack.c.b16 %v322, %v321
    %v443 = vpack.c.b16 %v324, %v323
    %v444 = vpack.c.b16 %v326, %v325
    %v445 = vpack.c.b16 %v328, %v327
    %v446 = vpack.c.b16 %v330, %v329
    %v447 = vpack.c.b16 %v332, %v331
    %v448 = vpack.c.b16 %v334, %v333
    %v449 = vpack.c.b16 %v336, %v335
    %v450 = vpack.c.b16 %v338, %v337
    %v451 = vpack.c.b16 %v340, %v339
    %v452 = vpack.c.b16 %v342, %v341
    %v453 = vpack.c.b16 %v344, %v343
    %v454 = vpack.c.b16 %v346, %v345
    %v455 = vpack.c.b16 %v348, %v347
    %v456 = vpack.c.b16 %v350, %v349
    %v457 = vpack.c.b16 %v352, %v351
    %v458 = vpack.c.b16 %v354, %v353
    %v459 = vpack.c.b16 %v356, %v355
    %v460 = vpack.c.b16 %v358, %v357
    %v461 = vpack.c.b16 %v360, %v359
    %v462 = vpack.c.b16 %v362, %v361
    %v463 = vpack.c.b16 %v364, %v363
    %v464 = vpack.c.b16 %v366, %v365
    %v465 = vpack.c.b16 %v368, %v367
    %v466 = vpack.c.b16 %v370, %v369
    %v467 = vpack.c.b16 %v372, %v371
    %v468 = vpack.c.b16 %v374, %v373
    %v469 = vpack.c.b16 %v376, %v375
    %v470 = vpack.c.b16 %v378, %v377
    %v471 = vpack.c.b16 %v380, %v379
    %v472 = vpack.c.b16 %v382, %v381
    %v473 = vpack.c.b16 %v384, %v383
    %v474 = vpack.c.b16 %v386, %v385
    %v475 = vpack.c.b16 %v388, %v387
    %v476 = vpack.c.b16 %v390, %v389
    %v477 = vpack.c.b16 %v392, %v391
    %v478 = vpack.c.b16 %v394, %v393
    %v479 = vpack.c.b16 %v396, %v395
    %v480 = vpack.c.b16 %v398, %v397
    %v481 = vpack.c.b16 %v400, %v399
    %v482 = vpack.c.b16 %v402, %v401
    %v483 = vpack.c.b16 %v404, %v403
    %v484 = vpack.c.b16 %v406, %v405
    %v485 = vpack.c.b16 %v408, %v407
    %v486 = vpack.c.b16 %v410, %v409
    %v487 = vpack.c.b16 %v412, %v411
    %v488 = vpack.c.b16 %v414, %v413
    %v489 = vpack.c.b16 %v416, %v415
    %v490 = vpack.c.b16 %v418, %v417
    %v491 = vpack.c.b16 %v420, %v419
    %v492 = vpack.c.b16 %v422, %v421
    %v493 = vpack.c.b16 %v424, %v423
    %v494 = vpack.c.b16 %v426, %v425
    %v495 = vpack.c.b16 %v428, %v427
    %v496 = vpack.c.b16 %v430, %v429
    %v497 = vpack.c.b16 %v432, %v431
    %v498 = vpack.c.b16 %v434, %v433
    %563 = vmatprep.subr.bf16.mxu0 0
    %564 = vmatpush1.bf16.msra.mxu0 %v435
    %565 = vmatprep.subr.bf16.mxu0 0
    %566 = vmatpush1.bf16.msra.mxu0 %v436
    %567 = vmatprep.subr.bf16.mxu0 0
    %568 = vmatpush1.bf16.msra.mxu0 %v437
    %569 = vmatprep.subr.bf16.mxu0 0
    %570 = vmatpush1.bf16.msra.mxu0 %v438
    %571 = vmatprep.subr.bf16.mxu0 0
    %572 = vmatpush1.bf16.msra.mxu0 %v439
    %573 = vmatprep.subr.bf16.mxu0 0
    %574 = vmatpush1.bf16.msra.mxu0 %v440
    %575 = vmatprep.subr.bf16.mxu0 0
    %576 = vmatpush1.bf16.msra.mxu0 %v441
    %577 = vmatprep.subr.bf16.mxu0 0
    %578 = vmatpush1.bf16.msra.mxu0 %v442
    %579 = vmatprep.subr.bf16.mxu0 0
    %580 = vmatpush1.bf16.msra.mxu0 %v443
    %581 = vmatprep.subr.bf16.mxu0 0
    %582 = vmatpush1.bf16.msra.mxu0 %v444
    %583 = vmatprep.subr.bf16.mxu0 0
    %584 = vmatpush1.bf16.msra.mxu0 %v445
    %585 = vmatprep.subr.bf16.mxu0 0
    %586 = vmatpush1.bf16.msra.mxu0 %v446
    %587 = vmatprep.subr.bf16.mxu0 0
    %588 = vmatpush1.bf16.msra.mxu0 %v447
    %589 = vmatprep.subr.bf16.mxu0 0
    %590 = vmatpush1.bf16.msra.mxu0 %v448
    %591 = vmatprep.subr.bf16.mxu0 0
    %592 = vmatpush1.bf16.msra.mxu0 %v449
    %593 = vmatprep.subr.bf16.mxu0 0
    %594 = vmatpush1.bf16.msra.mxu0 %v450
    %595 = vmatprep.mubr.bf16.mxu0 %v44
    %596 = vmatmul.mubr.bf16.gmra.mrb[0].mxu0 %v43
    %v597 = vpop.f32.mrb[0].mxu0
    %v598 = vadd.f32 0.0, %v597
    %v599 = vpop.f32.mrb[0].mxu0
    %v600 = vpop.f32.mrb[0].mxu0
    %v601 = vpop.f32.mrb[0].mxu0
    %602 = vdwg.mxu0
    %603 = vmatprep.subr.bf16.mxu0 0
    %604 = vmatpush1.bf16.msra.mxu0 %v451
    %605 = vmatprep.subr.bf16.mxu0 0
    %606 = vmatpush1.bf16.msra.mxu0 %v452
    %607 = vmatprep.subr.bf16.mxu0 0
    %608 = vmatpush1.bf16.msra.mxu0 %v453
    %609 = vmatprep.subr.bf16.mxu0 0
    %610 = vmatpush1.bf16.msra.mxu0 %v454
    %611 = vmatprep.subr.bf16.mxu0 0
    %612 = vmatpush1.bf16.msra.mxu0 %v455
    %613 = vmatprep.subr.bf16.mxu0 0
    %614 = vmatpush1.bf16.msra.mxu0 %v456
    %615 = vmatprep.subr.bf16.mxu0 0
    %616 = vmatpush1.bf16.msra.mxu0 %v457
    %617 = vmatprep.subr.bf16.mxu0 0
    %618 = vmatpush1.bf16.msra.mxu0 %v458
    %619 = vmatprep.subr.bf16.mxu0 0
    %620 = vmatpush1.bf16.msra.mxu0 %v459
    %621 = vmatprep.subr.bf16.mxu0 0
    %622 = vmatpush1.bf16.msra.mxu0 %v460
    %623 = vmatprep.subr.bf16.mxu0 0
    %624 = vmatpush1.bf16.msra.mxu0 %v461
    %625 = vmatprep.subr.bf16.mxu0 0
    %626 = vmatpush1.bf16.msra.mxu0 %v462
    %627 = vmatprep.subr.bf16.mxu0 0
    %628 = vmatpush1.bf16.msra.mxu0 %v463
    %629 = vmatprep.subr.bf16.mxu0 0
    %630 = vmatpush1.bf16.msra.mxu0 %v464
    %631 = vmatprep.subr.bf16.mxu0 0
    %632 = vmatpush1.bf16.msra.mxu0 %v465
    %633 = vmatprep.subr.bf16.mxu0 0
    %634 = vmatpush1.bf16.msra.mxu0 %v466
    %635 = vmatprep.mubr.bf16.mxu0 %v46
    %636 = vmatmul.mubr.bf16.gmra.mrb[0].mxu0 %v45
    %v637 = vpop.f32.mrb[0].mxu0
    %v638 = vadd.f32 %v598, %v637
    %v639 = vpop.f32.mrb[0].mxu0
    %v640 = vpop.f32.mrb[0].mxu0
    %v641 = vpop.f32.mrb[0].mxu0
    %642 = vdwg.mxu0
    %643 = vmatprep.subr.bf16.mxu0 0
    %644 = vmatpush1.bf16.msra.mxu0 %v467
    %645 = vmatprep.subr.bf16.mxu0 0
    %646 = vmatpush1.bf16.msra.mxu0 %v468
    %647 = vmatprep.subr.bf16.mxu0 0
    %648 = vmatpush1.bf16.msra.mxu0 %v469
    %649 = vmatprep.subr.bf16.mxu0 0
    %650 = vmatpush1.bf16.msra.mxu0 %v470
    %651 = vmatprep.subr.bf16.mxu0 0
    %652 = vmatpush1.bf16.msra.mxu0 %v471
    %653 = vmatprep.subr.bf16.mxu0 0
    %654 = vmatpush1.bf16.msra.mxu0 %v472
    %655 = vmatprep.subr.bf16.mxu0 0
    %656 = vmatpush1.bf16.msra.mxu0 %v473
    %657 = vmatprep.subr.bf16.mxu0 0
    %658 = vmatpush1.bf16.msra.mxu0 %v474
    %659 = vmatprep.subr.bf16.mxu0 0
    %660 = vmatpush1.bf16.msra.mxu0 %v475
    %661 = vmatprep.subr.bf16.mxu0 0
    %662 = vmatpush1.bf16.msra.mxu0 %v476
    %663 = vmatprep.subr.bf16.mxu0 0
    %664 = vmatpush1.bf16.msra.mxu0 %v477
    %665 = vmatprep.subr.bf16.mxu0 0
    %666 = vmatpush1.bf16.msra.mxu0 %v478
    %667 = vmatprep.subr.bf16.mxu0 0
    %668 = vmatpush1.bf16.msra.mxu0 %v479
    %669 = vmatprep.subr.bf16.mxu0 0
    %670 = vmatpush1.bf16.msra.mxu0 %v480
    %671 = vmatprep.subr.bf16.mxu0 0
    %672 = vmatpush1.bf16.msra.mxu0 %v481
    %673 = vmatprep.subr.bf16.mxu0 0
    %674 = vmatpush1.bf16.msra.mxu0 %v482
    %675 = vmatprep.mubr.bf16.mxu0 %v48
    %676 = vmatmul.mubr.bf16.gmra.mrb[0].mxu0 %v47
    %v677 = vpop.f32.mrb[0].mxu0
    %v678 = vadd.f32 %v638, %v677
    %v679 = vpop.f32.mrb[0].mxu0
    %v680 = vpop.f32.mrb[0].mxu0
    %v681 = vpop.f32.mrb[0].mxu0
    %682 = vdwg.mxu0
    %683 = vmatprep.subr.bf16.mxu0 0
    %684 = vmatpush1.bf16.msra.mxu0 %v483
    %685 = vmatprep.subr.bf16.mxu0 0
    %686 = vmatpush1.bf16.msra.mxu0 %v484
    %687 = vmatprep.subr.bf16.mxu0 0
    %688 = vmatpush1.bf16.msra.mxu0 %v485
    %689 = vmatprep.subr.bf16.mxu0 0
    %690 = vmatpush1.bf16.msra.mxu0 %v486
    %691 = vmatprep.subr.bf16.mxu0 0
    %692 = vmatpush1.bf16.msra.mxu0 %v487
    %693 = vmatprep.subr.bf16.mxu0 0
    %694 = vmatpush1.bf16.msra.mxu0 %v488
    %695 = vmatprep.subr.bf16.mxu0 0
    %696 = vmatpush1.bf16.msra.mxu0 %v489
    %697 = vmatprep.subr.bf16.mxu0 0
    %698 = vmatpush1.bf16.msra.mxu0 %v490
    %699 = vmatprep.subr.bf16.mxu0 0
    %700 = vmatpush1.bf16.msra.mxu0 %v491
    %701 = vmatprep.subr.bf16.mxu0 0
    %702 = vmatpush1.bf16.msra.mxu0 %v492
    %703 = vmatprep.subr.bf16.mxu0 0
    %704 = vmatpush1.bf16.msra.mxu0 %v493
    %705 = vmatprep.subr.bf16.mxu0 0
    %706 = vmatpush1.bf16.msra.mxu0 %v494
    %707 = vmatprep.subr.bf16.mxu0 0
    %708 = vmatpush1.bf16.msra.mxu0 %v495
    %709 = vmatprep.subr.bf16.mxu0 0
    %710 = vmatpush1.bf16.msra.mxu0 %v496
    %711 = vmatprep.subr.bf16.mxu0 0
    %712 = vmatpush1.bf16.msra.mxu0 %v497
    %713 = vmatprep.subr.bf16.mxu0 0
    %714 = vmatpush1.bf16.msra.mxu0 %v498
    %715 = vmatprep.mubr.bf16.mxu0 %v50
    %716 = vmatmul.mubr.bf16.gmra.mrb[0].mxu0 %v49
    %v717 = vpop.f32.mrb[0].mxu0
    %v718 = vadd.f32 %v678, %v717
    %v719 = vpop.f32.mrb[0].mxu0
    %v720 = vpop.f32.mrb[0].mxu0
    %v721 = vpop.f32.mrb[0].mxu0
    %722 = vdwg.mxu0
    %v723 = vadd.f32 %v34, %v718
    %724 = vst [vmem:[#allocation2] sm:$0xff] %v723
    // Predicated region
    $region22: #{clip_clf_forward.2} parent=1 // pred_check
      %p725 = pneg %p29
    $region23: #{clip_clf_forward.2} parent=1 // pred_check_branch
      %727 = sbr.rel (%p725) target = $region25
    $region24: #{clip_clf_forward.2} parent=1 // pred_region
      %v728 = vld [vmem:[#allocation2] sm:$0xff]
      %v729 = vld [vmem:[%s2] sm:$0x1]
      %v731 = vlaneseq
      %v732 = vshrl.u32 %v731, 7
      %v733 = vsub.s32 0, %v732
      %v734 = vrot.slane %v729, %v733
      %v736 = vadd.f32 %v728, %v734
      %v737 = vpack.c.bf16 %v736, %v736
      %738 = vst [vmem:[%s3] sm:$0xf] %v737
    $region25: #{clip_clf_forward.2} parent=1 // pred_fallthru
      _
    // Predicated region
    $region26: #{clip_clf_forward.2} parent=1 // pred_check
      _
    $region27: #{clip_clf_forward.2} parent=1 // pred_check_branch
      %740 = sbr.rel (0) target = $region29
    $region28: #{clip_clf_forward.2} parent=1 // pred_region
      _
    $region29: #{clip_clf_forward.2} parent=1 // pred_fallthru
      _
    // Predicated region
    $region30: #{clip_clf_forward.2} parent=1 // pred_check
      _
    $region31: #{clip_clf_forward.2} parent=1 // pred_check_branch
      %742 = sbr.rel (0) target = $region33
    $region32: #{clip_clf_forward.2} parent=1 // pred_region
      _
    $region33: #{clip_clf_forward.2} parent=1 // pred_fallthru
      _
    %743 = vsyncpa [#allocation4], 1

// kernel: clip_clf_forward.3
$region0: #{clip_clf_forward.3}
  #allocation0 [shape = 'u32[]', space=smem, size = 0x4, offset = 0x4, fixed_abs, tag = 'smem constant byte address 0x4 - core index']
  #allocation1 [shape = 'u32[144,128]{1,0:T(1,128)}', space=vmem, size = 0x12000, scoped, tag = 'internal scratch']
  %s0 = inlined_call_operand.vmem [shape: bf16[8,128], index: 0, kind: input, shape index: {}]
  %s1 = inlined_call_operand.vmem [shape: bf16[8,8,128], index: 1, kind: input, shape index: {}]
  %s2 = inlined_call_operand.vmem [shape: bf16[128,128], index: 2, kind: input, shape index: {}]
  %s3 = inlined_call_operand.vmem [shape: f32[1,128], index: 3, kind: input, shape index: {}]
  %s4 = inlined_call_operand.vmem [shape: bf16[128,128], index: 4, kind: input, shape index: {}]
  %s5 = inlined_call_operand.vmem [shape: bf16[128,128], index: 5, kind: input, shape index: {}]
  %s6 = inlined_call_operand.vmem [shape: f32[1,128], index: 6, kind: input, shape index: {}]
  %s7 = inlined_call_operand.vmem [shape: f32[8,128], index: 7, kind: output, shape index: {}]
  %s8 = sld [smem:[#allocation0]]
  $region38: #{clip_clf_forward.3} parent=0
    _
  %s10 = ssub.s32 1, %s8
  %s11 = scalar_select 0, %s10, %s8
  // Predicated region
  $region2: #{clip_clf_forward.3} parent=0 // pred_check
    _
  $region3: #{clip_clf_forward.3} parent=0 // pred_check_branch
    %13 = sbr.rel (0) target = $region5
  $region4: #{clip_clf_forward.3} parent=0 // pred_region
    _
  $region5: #{clip_clf_forward.3} parent=0 // pred_fallthru
    _
  // Predicated region
  $region6: #{clip_clf_forward.3} parent=0 // pred_check
    _
  $region7: #{clip_clf_forward.3} parent=0 // pred_check_branch
    %15 = sbr.rel (0) target = $region9
  $region8: #{clip_clf_forward.3} parent=0 // pred_region
    _
  $region9: #{clip_clf_forward.3} parent=0 // pred_fallthru
    _
  // Predicated region
  $region10: #{clip_clf_forward.3} parent=0 // pred_check
    _
  $region11: #{clip_clf_forward.3} parent=0 // pred_check_branch
    %17 = sbr.rel (0) target = $region13
  $region12: #{clip_clf_forward.3} parent=0 // pred_region
    _
  $region13: #{clip_clf_forward.3} parent=0 // pred_fallthru
    _
  // Predicated region
  $region14: #{clip_clf_forward.3} parent=0 // pred_check
    _
  $region15: #{clip_clf_forward.3} parent=0 // pred_check_branch
    %19 = sbr.rel (0) target = $region17
  $region16: #{clip_clf_forward.3} parent=0 // pred_region
    _
  $region17: #{clip_clf_forward.3} parent=0 // pred_fallthru
    _
  // Predicated region
  $region18: #{clip_clf_forward.3} parent=0 // pred_check
    _
  $region19: #{clip_clf_forward.3} parent=0 // pred_check_branch
    %21 = sbr.rel (0) target = $region21
  $region20: #{clip_clf_forward.3} parent=0 // pred_region
    _
  $region21: #{clip_clf_forward.3} parent=0 // pred_fallthru
    _
  // Predicated region
  $region22: #{clip_clf_forward.3} parent=0 // pred_check
    _
  $region23: #{clip_clf_forward.3} parent=0 // pred_check_branch
    %23 = sbr.rel (0) target = $region25
  $region24: #{clip_clf_forward.3} parent=0 // pred_region
    _
  $region25: #{clip_clf_forward.3} parent=0 // pred_fallthru
    _
  // Predicated region
  $region26: #{clip_clf_forward.3} parent=0 // pred_check
    _
  $region27: #{clip_clf_forward.3} parent=0 // pred_check_branch
    %25 = sbr.rel (0) target = $region29
  $region28: #{clip_clf_forward.3} parent=0 // pred_region
    _
  $region29: #{clip_clf_forward.3} parent=0 // pred_fallthru
    _
  %v27 = vld [vmem:[%s1] sm:$0xf]
  %v28 = vld [vmem:[%s1 + $0x4] sm:$0xf]
  %v29 = vld [vmem:[%s1 + $0x8] sm:$0xf]
  %v30 = vld [vmem:[%s1 + $0xc] sm:$0xf]
  %v31 = vld [vmem:[%s1 + $0x10] sm:$0xf]
  %v32 = vld [vmem:[%s1 + $0x14] sm:$0xf]
  %v33 = vld [vmem:[%s1 + $0x18] sm:$0xf]
  %v34 = vld [vmem:[%s1 + $0x1c] sm:$0xf]
  %v35 = vunpack.c.l.bf16 %v27
  %v36 = vunpack.c.l.bf16 %v28
  %v37 = vunpack.c.l.bf16 %v29
  %v38 = vunpack.c.l.bf16 %v30
  %v39 = vunpack.c.l.bf16 %v31
  %v40 = vunpack.c.l.bf16 %v32
  %v41 = vunpack.c.l.bf16 %v33
  %v42 = vunpack.c.l.bf16 %v34
  %v43 = vrot.slane %v35, 4
  %v44 = vadd.f32 %v35, %v43
  %v45 = vrot.slane %v44, 2
  %v46 = vadd.f32 %v44, %v45
  %v47 = vrot.slane %v46, 1
  %v48 = vadd.f32 %v46, %v47
  %v49 = vrot.slane %v36, 4
  %v50 = vadd.f32 %v36, %v49
  %v51 = vrot.slane %v50, 2
  %v52 = vadd.f32 %v50, %v51
  %v53 = vrot.slane %v52, 1
  %v54 = vadd.f32 %v52, %v53
  %v55 = vrot.slane %v37, 4
  %v56 = vadd.f32 %v37, %v55
  %v57 = vrot.slane %v56, 2
  %v58 = vadd.f32 %v56, %v57
  %v59 = vrot.slane %v58, 1
  %v60 = vadd.f32 %v58, %v59
  %v61 = vrot.slane %v38, 4
  %v62 = vadd.f32 %v38, %v61
  %v63 = vrot.slane %v62, 2
  %v64 = vadd.f32 %v62, %v63
  %v65 = vrot.slane %v64, 1
  %v66 = vadd.f32 %v64, %v65
  %v67 = vrot.slane %v39, 4
  %v68 = vadd.f32 %v39, %v67
  %v69 = vrot.slane %v68, 2
  %v70 = vadd.f32 %v68, %v69
  %v71 = vrot.slane %v70, 1
  %v72 = vadd.f32 %v70, %v71
  %v73 = vrot.slane %v40, 4
  %v74 = vadd.f32 %v40, %v73
  %v75 = vrot.slane %v74, 2
  %v76 = vadd.f32 %v74, %v75
  %v77 = vrot.slane %v76, 1
  %v78 = vadd.f32 %v76, %v77
  %v79 = vrot.slane %v41, 4
  %v80 = vadd.f32 %v41, %v79
  %v81 = vrot.slane %v80, 2
  %v82 = vadd.f32 %v80, %v81
  %v83 = vrot.slane %v82, 1
  %v84 = vadd.f32 %v82, %v83
  %v85 = vrot.slane %v42, 4
  %v86 = vadd.f32 %v42, %v85
  %v87 = vrot.slane %v86, 2
  %v88 = vadd.f32 %v86, %v87
  %v89 = vrot.slane %v88, 1
  %v90 = vadd.f32 %v88, %v89
  %v91 = vmul.f32 %v48, 0.125
  %v92 = vmul.f32 %v54, 0.125
  %v93 = vmul.f32 %v60, 0.125
  %v94 = vmul.f32 %v66, 0.125
  %v95 = vmul.f32 %v72, 0.125
  %v96 = vmul.f32 %v78, 0.125
  %v97 = vmul.f32 %v84, 0.125
  %v98 = vmul.f32 %v90, 0.125
  %v99 = vpack.c.bf16 %v91, %v91
  %v100 = vpack.c.bf16 %v92, %v92
  %v101 = vpack.c.bf16 %v93, %v93
  %v102 = vpack.c.bf16 %v94, %v94
  %v103 = vpack.c.bf16 %v95, %v95
  %v104 = vpack.c.bf16 %v96, %v96
  %v105 = vpack.c.bf16 %v97, %v97
  %v106 = vpack.c.bf16 %v98, %v98
  %v107 = vld [vmem:[%s2] sm:$0xf]
  %v108 = vld [vmem:[%s2 + $0x4] sm:$0xf]
  %v109 = vld [vmem:[%s2 + $0x8] sm:$0xf]
  %v110 = vld [vmem:[%s2 + $0xc] sm:$0xf]
  %v111 = vld [vmem:[%s2 + $0x10] sm:$0xf]
  %v112 = vld [vmem:[%s2 + $0x14] sm:$0xf]
  %v113 = vld [vmem:[%s2 + $0x18] sm:$0xf]
  %v114 = vld [vmem:[%s2 + $0x1c] sm:$0xf]
  %v115 = vld [vmem:[%s2 + $0x20] sm:$0xf]
  %v116 = vld [vmem:[%s2 + $0x24] sm:$0xf]
  %v117 = vld [vmem:[%s2 + $0x28] sm:$0xf]
  %v118 = vld [vmem:[%s2 + $0x2c] sm:$0xf]
  %v119 = vld [vmem:[%s2 + $0x30] sm:$0xf]
  %v120 = vld [vmem:[%s2 + $0x34] sm:$0xf]
  %v121 = vld [vmem:[%s2 + $0x38] sm:$0xf]
  %v122 = vld [vmem:[%s2 + $0x3c] sm:$0xf]
  %v123 = vld [vmem:[%s3] sm:$0x1]
  %v125 = vlaneseq
  %v126 = vshrl.u32 %v125, 7
  %v127 = vsub.s32 0, %v126
  %v128 = vrot.slane %v123, %v127
  %v138 = vunpack.c.l.b16 %v99
  %v139 = vunpack.c.l.b16 %v100
  %v140 = vunpack.c.l.b16 %v101
  %v141 = vunpack.c.l.b16 %v102
  %v142 = vunpack.c.l.b16 %v103
  %v143 = vunpack.c.l.b16 %v104
  %v144 = vunpack.c.l.b16 %v105
  %v145 = vunpack.c.l.b16 %v106
  %vm146 = vcmask 1041409
  %v147 = vsel %vm146, %v139, %v138
  %vm148 = vcmask 1042434
  %v149 = vsel %vm148, %v140, %v147
  %vm150 = vcmask 1043459
  %v151 = vsel %vm150, %v141, %v149
  %vm152 = vcmask 1044484
  %v153 = vsel %vm152, %v142, %v151
  %vm154 = vcmask 1045509
  %v155 = vsel %vm154, %v143, %v153
  %vm156 = vcmask 1046534
  %v157 = vsel %vm156, %v144, %v155
  %vm158 = vcmask 1047559
  %v159 = vsel %vm158, %v145, %v157
  %v160 = vpack.c.b16 %v159, %v159
  %v178 = vunpack.c.l.b16 %v107
  %v179 = vunpack.c.l.b16 %v108
  %v180 = vunpack.c.l.b16 %v109
  %v181 = vunpack.c.l.b16 %v110
  %v182 = vunpack.c.l.b16 %v111
  %v183 = vunpack.c.l.b16 %v112
  %v184 = vunpack.c.l.b16 %v113
  %v185 = vunpack.c.l.b16 %v114
  %v186 = vunpack.c.l.b16 %v115
  %v187 = vunpack.c.l.b16 %v116
  %v188 = vunpack.c.l.b16 %v117
  %v189 = vunpack.c.l.b16 %v118
  %v190 = vunpack.c.l.b16 %v119
  %v191 = vunpack.c.l.b16 %v120
  %v192 = vunpack.c.l.b16 %v121
  %v193 = vunpack.c.l.b16 %v122
  %v194 = vpack.c.b16 %v179, %v178
  %v195 = vpack.c.b16 %v181, %v180
  %v196 = vpack.c.b16 %v183, %v182
  %v197 = vpack.c.b16 %v185, %v184
  %v198 = vpack.c.b16 %v187, %v186
  %v199 = vpack.c.b16 %v189, %v188
  %v200 = vpack.c.b16 %v191, %v190
  %v201 = vpack.c.b16 %v193, %v192
  %210 = vmatprep.subr.bf16.mxu0 0
  %211 = vmatpush1.bf16.msra.mxu0 %v194
  %212 = vmatprep.subr.bf16.mxu0 0
  %213 = vmatpush1.bf16.msra.mxu0 %v195
  %214 = vmatprep.subr.bf16.mxu0 0
  %215 = vmatpush1.bf16.msra.mxu0 %v196
  %216 = vmatprep.subr.bf16.mxu0 0
  %217 = vmatpush1.bf16.msra.mxu0 %v197
  %218 = vmatprep.subr.bf16.mxu0 0
  %219 = vmatpush1.bf16.msra.mxu0 %v198
  %220 = vmatprep.subr.bf16.mxu0 0
  %221 = vmatpush1.bf16.msra.mxu0 %v199
  %222 = vmatprep.subr.bf16.mxu0 0
  %223 = vmatpush1.bf16.msra.mxu0 %v200
  %224 = vmatprep.subr.bf16.mxu0 0
  %225 = vmatpush1.bf16.msra.mxu0 %v201
  %226 = vmatprep.subr.bf16.mxu0 0
  %227 = vmatpush1.bf16.msra.mxu0 0
  %228 = vmatprep.subr.bf16.mxu0 0
  %229 = vmatpush1.bf16.msra.mxu0 0
  %230 = vmatprep.subr.bf16.mxu0 0
  %231 = vmatpush1.bf16.msra.mxu0 0
  %232 = vmatprep.subr.bf16.mxu0 0
  %233 = vmatpush1.bf16.msra.mxu0 0
  %234 = vmatprep.subr.bf16.mxu0 0
  %235 = vmatpush1.bf16.msra.mxu0 0
  %236 = vmatprep.subr.bf16.mxu0 0
  %237 = vmatpush1.bf16.msra.mxu0 0
  %238 = vmatprep.subr.bf16.mxu0 0
  %239 = vmatpush1.bf16.msra.mxu0 0
  %240 = vmatprep.subr.bf16.mxu0 0
  %241 = vmatpush1.bf16.msra.mxu0 0
  %242 = vmatprep.mubr.bf16.mxu0 0
  %243 = vmatmul.mubr.bf16.gmra.mrb[0].mxu0 %v160
  %v244 = vpop.f32.mrb[0].mxu0
  %v245 = vadd.f32 %v128, %v244
  %v246 = vpop.f32.mrb[0].mxu0
  %v247 = vpop.f32.mrb[0].mxu0
  %v248 = vpop.f32.mrb[0].mxu0
  %249 = vdwg.mxu0
  %v250 = vld [vmem:[%s0] sm:$0xf]
  %v251 = vld [vmem:[%s4] sm:$0xf]
  %v252 = vld [vmem:[%s4 + $0x4] sm:$0xf]
  %v253 = vld [vmem:[%s4 + $0x8] sm:$0xf]
  %v254 = vld [vmem:[%s4 + $0xc] sm:$0xf]
  %v255 = vld [vmem:[%s4 + $0x10] sm:$0xf]
  %v256 = vld [vmem:[%s4 + $0x14] sm:$0xf]
  %v257 = vld [vmem:[%s4 + $0x18] sm:$0xf]
  %v258 = vld [vmem:[%s4 + $0x1c] sm:$0xf]
  %v259 = vld [vmem:[%s4 + $0x20] sm:$0xf]
  %v260 = vld [vmem:[%s4 + $0x24] sm:$0xf]
  %v261 = vld [vmem:[%s4 + $0x28] sm:$0xf]
  %v262 = vld [vmem:[%s4 + $0x2c] sm:$0xf]
  %v263 = vld [vmem:[%s4 + $0x30] sm:$0xf]
  %v264 = vld [vmem:[%s4 + $0x34] sm:$0xf]
  %v265 = vld [vmem:[%s4 + $0x38] sm:$0xf]
  %v266 = vld [vmem:[%s4 + $0x3c] sm:$0xf]
  %v267 = vpack.c.bf16 %v245, %v245
  %v268 = vld [vmem:[%s5] sm:$0xf]
  %v269 = vld [vmem:[%s5 + $0x4] sm:$0xf]
  %v270 = vld [vmem:[%s5 + $0x8] sm:$0xf]
  %v271 = vld [vmem:[%s5 + $0xc] sm:$0xf]
  %v272 = vld [vmem:[%s5 + $0x10] sm:$0xf]
  %v273 = vld [vmem:[%s5 + $0x14] sm:$0xf]
  %v274 = vld [vmem:[%s5 + $0x18] sm:$0xf]
  %v275 = vld [vmem:[%s5 + $0x1c] sm:$0xf]
  %v276 = vld [vmem:[%s5 + $0x20] sm:$0xf]
  %v277 = vld [vmem:[%s5 + $0x24] sm:$0xf]
  %v278 = vld [vmem:[%s5 + $0x28] sm:$0xf]
  %v279 = vld [vmem:[%s5 + $0x2c] sm:$0xf]
  %v280 = vld [vmem:[%s5 + $0x30] sm:$0xf]
  %v281 = vld [vmem:[%s5 + $0x34] sm:$0xf]
  %v282 = vld [vmem:[%s5 + $0x38] sm:$0xf]
  %v283 = vld [vmem:[%s5 + $0x3c] sm:$0xf]
  %v300 = vunpack.c.l.b16 %v268
  %v301 = vunpack.c.l.b16 %v269
  %v302 = vunpack.c.l.b16 %v270
  %v303 = vunpack.c.l.b16 %v271
  %v304 = vunpack.c.l.b16 %v272
  %v305 = vunpack.c.l.b16 %v273
  %v306 = vunpack.c.l.b16 %v274
  %v307 = vunpack.c.l.b16 %v275
  %v308 = vunpack.c.l.b16 %v276
  %v309 = vunpack.c.l.b16 %v277
  %v310 = vunpack.c.l.b16 %v278
  %v311 = vunpack.c.l.b16 %v279
  %v312 = vunpack.c.l.b16 %v280
  %v313 = vunpack.c.l.b16 %v281
  %v314 = vunpack.c.l.b16 %v282
  %v315 = vunpack.c.l.b16 %v283
  %v316 = vpack.c.b16 %v301, %v300
  %v317 = vpack.c.b16 %v303, %v302
  %v318 = vpack.c.b16 %v305, %v304
  %v319 = vpack.c.b16 %v307, %v306
  %v320 = vpack.c.b16 %v309, %v308
  %v321 = vpack.c.b16 %v311, %v310
  %v322 = vpack.c.b16 %v313, %v312
  %v323 = vpack.c.b16 %v315, %v314
  %332 = vmatprep.subr.bf16.mxu0 0
  %333 = vmatpush1.bf16.msra.mxu0 %v316
  %334 = vmatprep.subr.bf16.mxu0 0
  %335 = vmatpush1.bf16.msra.mxu0 %v317
  %336 = vmatprep.subr.bf16.mxu0 0
  %337 = vmatpush1.bf16.msra.mxu0 %v318
  %338 = vmatprep.subr.bf16.mxu0 0
  %339 = vmatpush1.bf16.msra.mxu0 %v319
  %340 = vmatprep.subr.bf16.mxu0 0
  %341 = vmatpush1.bf16.msra.mxu0 %v320
  %342 = vmatprep.subr.bf16.mxu0 0
  %343 = vmatpush1.bf16.msra.mxu0 %v321
  %344 = vmatprep.subr.bf16.mxu0 0
  %345 = vmatpush1.bf16.msra.mxu0 %v322
  %346 = vmatprep.subr.bf16.mxu0 0
  %347 = vmatpush1.bf16.msra.mxu0 %v323
  %348 = vmatprep.subr.bf16.mxu0 0
  %349 = vmatpush1.bf16.msra.mxu0 0
  %350 = vmatprep.subr.bf16.mxu0 0
  %351 = vmatpush1.bf16.msra.mxu0 0
  %352 = vmatprep.subr.bf16.mxu0 0
  %353 = vmatpush1.bf16.msra.mxu0 0
  %354 = vmatprep.subr.bf16.mxu0 0
  %355 = vmatpush1.bf16.msra.mxu0 0
  %356 = vmatprep.subr.bf16.mxu0 0
  %357 = vmatpush1.bf16.msra.mxu0 0
  %358 = vmatprep.subr.bf16.mxu0 0
  %359 = vmatpush1.bf16.msra.mxu0 0
  %360 = vmatprep.subr.bf16.mxu0 0
  %361 = vmatpush1.bf16.msra.mxu0 0
  %362 = vmatprep.subr.bf16.mxu0 0
  %363 = vmatpush1.bf16.msra.mxu0 0
  %364 = vmatprep.mubr.bf16.mxu0 0
  %365 = vmatmul.mubr.bf16.gmra.mrb[0].mxu0 %v267
  %v366 = vpop.f32.mrb[0].mxu0
  %v367 = vadd.f32 0.0, %v366
  %v368 = vpop.f32.mrb[0].mxu0
  %v369 = vpop.f32.mrb[0].mxu0
  %v370 = vpop.f32.mrb[0].mxu0
  %371 = vdwg.mxu0
  %v388 = vunpack.c.l.b16 %v251
  %v389 = vunpack.c.l.b16 %v252
  %v390 = vunpack.c.l.b16 %v253
  %v391 = vunpack.c.l.b16 %v254
  %v392 = vunpack.c.l.b16 %v255
  %v393 = vunpack.c.l.b16 %v256
  %v394 = vunpack.c.l.b16 %v257
  %v395 = vunpack.c.l.b16 %v258
  %v396 = vunpack.c.l.b16 %v259
  %v397 = vunpack.c.l.b16 %v260
  %v398 = vunpack.c.l.b16 %v261
  %v399 = vunpack.c.l.b16 %v262
  %v400 = vunpack.c.l.b16 %v263
  %v401 = vunpack.c.l.b16 %v264
  %v402 = vunpack.c.l.b16 %v265
  %v403 = vunpack.c.l.b16 %v266
  %v404 = vpack.c.b16 %v389, %v388
  %v405 = vpack.c.b16 %v391, %v390
  %v406 = vpack.c.b16 %v393, %v392
  %v407 = vpack.c.b16 %v395, %v394
  %v408 = vpack.c.b16 %v397, %v396
  %v409 = vpack.c.b16 %v399, %v398
  %v410 = vpack.c.b16 %v401, %v400
  %v411 = vpack.c.b16 %v403, %v402
  %420 = vmatprep.subr.bf16.mxu0 0
  %421 = vmatpush1.bf16.msra.mxu0 %v404
  %422 = vmatprep.subr.bf16.mxu0 0
  %423 = vmatpush1.bf16.msra.mxu0 %v405
  %424 = vmatprep.subr.bf16.mxu0 0
  %425 = vmatpush1.bf16.msra.mxu0 %v406
  %426 = vmatprep.subr.bf16.mxu0 0
  %427 = vmatpush1.bf16.msra.mxu0 %v407
  %428 = vmatprep.subr.bf16.mxu0 0
  %429 = vmatpush1.bf16.msra.mxu0 %v408
  %430 = vmatprep.subr.bf16.mxu0 0
  %431 = vmatpush1.bf16.msra.mxu0 %v409
  %432 = vmatprep.subr.bf16.mxu0 0
  %433 = vmatpush1.bf16.msra.mxu0 %v410
  %434 = vmatprep.subr.bf16.mxu0 0
  %435 = vmatpush1.bf16.msra.mxu0 %v411
  %436 = vmatprep.subr.bf16.mxu0 0
  %437 = vmatpush1.bf16.msra.mxu0 0
  %438 = vmatprep.subr.bf16.mxu0 0
  %439 = vmatpush1.bf16.msra.mxu0 0
  %440 = vmatprep.subr.bf16.mxu0 0
  %441 = vmatpush1.bf16.msra.mxu0 0
  %442 = vmatprep.subr.bf16.mxu0 0
  %443 = vmatpush1.bf16.msra.mxu0 0
  %444 = vmatprep.subr.bf16.mxu0 0
  %445 = vmatpush1.bf16.msra.mxu0 0
  %446 = vmatprep.subr.bf16.mxu0 0
  %447 = vmatpush1.bf16.msra.mxu0 0
  %448 = vmatprep.subr.bf16.mxu0 0
  %449 = vmatpush1.bf16.msra.mxu0 0
  %450 = vmatprep.subr.bf16.mxu0 0
  %451 = vmatpush1.bf16.msra.mxu0 0
  %452 = vmatprep.mubr.bf16.mxu0 0
  %453 = vmatmul.mubr.bf16.gmra.mrb[0].mxu0 %v250
  %v454 = vpop.f32.mrb[0].mxu0
  %v455 = vadd.f32 %v367, %v454
  %v456 = vpop.f32.mrb[0].mxu0
  %v457 = vpop.f32.mrb[0].mxu0
  %v458 = vpop.f32.mrb[0].mxu0
  %459 = vdwg.mxu0
  %v460 = vld [vmem:[%s6] sm:$0x1]
  %v462 = vlaneseq
  %v463 = vshrl.u32 %v462, 7
  %v464 = vsub.s32 0, %v463
  %v465 = vrot.slane %v460, %v464
  %v467 = vadd.f32 %v455, %v465
  %468 = vst [vmem:[%s7] sm:$0xff] %v467
  // Predicated region
  $region30: #{clip_clf_forward.3} parent=0 // pred_check
    _
  $region31: #{clip_clf_forward.3} parent=0 // pred_check_branch
    %470 = sbr.rel (0) target = $region33
  $region32: #{clip_clf_forward.3} parent=0 // pred_region
    _
  $region33: #{clip_clf_forward.3} parent=0 // pred_fallthru
    _
  // Predicated region
  $region34: #{clip_clf_forward.3} parent=0 // pred_check
    _
  $region35: #{clip_clf_forward.3} parent=0 // pred_check_branch
    %472 = sbr.rel (0) target = $region37
  $region36: #{clip_clf_forward.3} parent=0 // pred_region
    _
  $region37: #{clip_clf_forward.3} parent=0 // pred_fallthru
    _

</llo_original>
